<compile_context>
chip_gen: v5e
topology: v5e:2x2
jax: 0.10.0
libtpu: 0.0.40
codegen_flags: <defaults>
</compile_context>

<pallas_src>
import functools

import jax
import jax.numpy as jnp
from jax.experimental import pallas as pl
from jax.experimental.pallas import tpu as pltpu


def _floordiv_f32(x, d):
    """floor(x / d) for non-negative, exact-integer-valued f32 x and small int d.

    f32 divide + truncating cast (plain VPU ops) instead of vectorized s32
    div/mod.  Exact for the small index ranges used here (< 2^20 / d).
    """
    return (x / jnp.float32(d)).astype(jnp.int32).astype(jnp.float32)


def _detection_kernel(p_ref, o_ref, *, attrs, num_anchors, grid_size, stride,
                      anchors_w, anchors_h, block_rows):
    p = p_ref[...]                                   # (block_rows, L) f32
    br, L = p.shape

    # ---- per-row (sublane) terms at (br, 1): row = (b*na + a)*attrs + attr ----
    row = (jax.lax.broadcasted_iota(jnp.int32, (br, 1), 0)
           + pl.program_id(0) * block_rows).astype(jnp.float32)
    row_div_a = _floordiv_f32(row, attrs)
    attr = row - row_div_a * attrs                                   # row % attrs
    a_idx = row_div_a - _floordiv_f32(row_div_a, num_anchors) * num_anchors

    is_x = attr == 0.0
    is_y = attr == 1.0
    is_w = attr == 2.0
    is_h = attr == 3.0
    is_wh = is_w | is_h

    # per-anchor w/h selected from the static anchor list (na is tiny, e.g. 3)
    anc = jnp.full((br, 1), anchors_w[-1], jnp.float32)
    anc = jnp.where(is_h, jnp.float32(anchors_h[-1]), anc)
    for k in range(num_anchors - 1):
        sel = a_idx == float(k)
        anc = jnp.where(sel & is_w, jnp.float32(anchors_w[k]), anc)
        anc = jnp.where(sel & is_h, jnp.float32(anchors_h[k]), anc)

    # multiplier: stride for x/y, anchor w/h for w/h, 1 for objectness/classes
    mul = jnp.where(is_x | is_y, jnp.float32(stride),
                    jnp.where(is_wh, anc, jnp.float32(1.0)))
    # sign: +p on w/h rows (exp), -p elsewhere (sigmoid)
    sgn = jnp.where(is_wh, jnp.float32(1.0), jnp.float32(-1.0))

    # ---- per-lane (lane) terms at (1, L): cell -> grid x/y offsets ----
    cell = jax.lax.broadcasted_iota(jnp.int32, (1, L), 1).astype(jnp.float32)
    gy = _floordiv_f32(cell, grid_size)
    gx = cell - gy * grid_size

    # additive grid offset: gx on x rows, gy on y rows, 0 otherwise  -> (br, L)
    bias = jnp.where(is_x, gx, jnp.where(is_y, gy, jnp.float32(0.0)))

    # ---- full-tile math: ONE exp feeds both the sigmoid and the w/h exp ----
    e = jnp.exp(p * sgn)                      # exp(p) on w/h rows, exp(-p) else
    # exact reciprocal keeps agreement with the reference; approx=True is a
    # free EUP win if downstream tolerance allows it.
    sig = pl.reciprocal(1.0 + e, approx=False)
    o_ref[...] = jnp.where(is_wh, e, sig + bias) * mul


def _choose_row_tiling(num_rows, num_lanes, target_block_bytes=1 << 20):
    """~1 MiB f32 row tiles (multiple of 8 rows).  If everything fits in one
    block, split into (up to) two so the "parallel" grid can shard across
    v7x's two TensorCores.  Grid uses cdiv; Pallas masks the overhang block."""
    bytes_per_row = 4 * num_lanes
    rows8 = -(-num_rows // 8) * 8                     # rows rounded up to sublanes
    br = max(8, (target_block_bytes // bytes_per_row) // 8 * 8)
    br = min(br, rows8)
    if br >= rows8 and rows8 >= 16:
        br = -(-(rows8 // 2) // 8) * 8
    grid = -(-num_rows // br)
    return br, grid


def predict_transform(x, inp_dim, anchors, num_classes, confidence=None):
    """x: [B, num_anchors*(5+num_classes), G, G] float32 (NCHW, like PyTorch)."""
    x = jnp.asarray(x, jnp.float32)
    B, C, G, G2 = x.shape
    assert G == G2
    na = len(anchors)
    A = 5 + num_classes
    assert C == na * A
    stride = inp_dim // G
    L = G * G                      # lane axis (spatial cells)
    R = B * na * A                 # row axis (batch, anchor, attribute)

    # lane-dense layout: attributes on rows, spatial cells on lanes (free view)
    p2d = x.reshape(R, L)

    br, grid = _choose_row_tiling(R, L)

    kernel = functools.partial(
        _detection_kernel,
        attrs=A, num_anchors=na, grid_size=G, stride=float(stride),
        anchors_w=tuple(float(a[0]) for a in anchors),
        anchors_h=tuple(float(a[1]) for a in anchors),
        block_rows=br)

    spec = pl.BlockSpec((br, L), lambda i: (i, 0))
    out2d = pl.pallas_call(
        kernel,
        out_shape=jax.ShapeDtypeStruct((R, L), jnp.float32),
        grid_spec=pltpu.PrefetchScalarGridSpec(
            num_scalar_prefetch=0,
            grid=(grid,),
            in_specs=[spec],
            out_specs=spec,
        ),
        compiler_params=pltpu.CompilerParams(
            dimension_semantics=("parallel",)),
    )(p2d)

    # post-kernel glue: exact mirror of the PyTorch view/transpose/view
    # [B*na*A, G*G] -> [B, na, A, G*G] -> [B, G*G, na, A] -> [B, G*G*na, A]
    out = out2d.reshape(B, na, A, L).transpose(0, 3, 1, 2).reshape(B, L * na, A)
    return out


class DetectionLayer:
    """JAX/Pallas port of the YOLO DetectionLayer."""

    def __init__(self, anchors):
        self.anchors = anchors

    def __call__(self, x, inp_dim, num_classes, confidence):
        return predict_transform(x, inp_dim, self.anchors, num_classes, confidence)


def _reference(x, inp_dim, anchors, num_classes):
    """Pure-JAX reference mirroring the PyTorch predict_transform."""
    x = jnp.asarray(x, jnp.float32)
    B, C, G, _ = x.shape
    na = len(anchors)
    A = 5 + num_classes
    stride = inp_dim // G
    pred = x.reshape(B, A * na, G * G).transpose(0, 2, 1).reshape(B, G * G * na, A)
    anc_s = jnp.asarray([(a[0] / stride, a[1] / stride) for a in anchors], jnp.float32)

    sig = jax.nn.sigmoid(pred)
    gx, gy = jnp.meshgrid(jnp.arange(G, dtype=jnp.float32),
                          jnp.arange(G, dtype=jnp.float32))
    xy = jnp.stack([gx.reshape(-1), gy.reshape(-1)], axis=1)
    xy = jnp.repeat(xy, na, axis=0)[None]                       # [1, G*G*na, 2]
    anc = jnp.tile(anc_s, (G * G, 1))[None]                     # [1, G*G*na, 2]

    out = pred
    out = out.at[:, :, 0:2].set(sig[:, :, 0:2] + xy)
    out = out.at[:, :, 4].set(sig[:, :, 4])
    out = out.at[:, :, 2:4].set(jnp.exp(pred[:, :, 2:4]) * anc)
    out = out.at[:, :, 5:5 + num_classes].set(sig[:, :, 5:5 + num_classes])
    out = out.at[:, :, 0:4].set(out[:, :, 0:4] * stride)
    return out


if __name__ == "__main__":
    key = jax.random.PRNGKey(0)
    anchors = [(10.0, 13.0), (16.0, 30.0), (33.0, 23.0)]
    na = len(anchors)
    layer = DetectionLayer(anchors)
    k1, k2 = jax.random.split(key)

    # --- case 1: batch=2, 3 anchors, 3 classes -> 24 channels, 16x16 grid ---
    B, num_classes, G, inp_dim = 2, 3, 16, 32                    # stride = 2
    C = na * (5 + num_classes)
    x = jax.random.normal(k1, (B, C, G, G), dtype=jnp.float32)
    out = jax.block_until_ready(layer(x, inp_dim, num_classes, confidence=0.5))
    ref = _reference(x, inp_dim, anchors, num_classes)
    assert out.shape == (B, G * G * na, 5 + num_classes)
    assert jnp.allclose(out, ref, atol=1e-5, rtol=1e-5), "mismatch vs reference (case 1)"

    # --- case 2: awkward row count (B=1, 2 classes, 13x13 grid) -> exercises the
    #             masked overhang block (R = 21 rows, L = 169 lanes) ---
    B2, num_classes2, G2, inp_dim2 = 1, 2, 13, 416               # stride = 32
    C2 = na * (5 + num_classes2)
    x2 = jax.random.normal(k2, (B2, C2, G2, G2), dtype=jnp.float32)
    out2 = jax.block_until_ready(layer(x2, inp_dim2, num_classes2, confidence=0.5))
    ref2 = _reference(x2, inp_dim2, anchors, num_classes2)
    assert out2.shape == (B2, G2 * G2 * na, 5 + num_classes2)
    assert jnp.allclose(out2, ref2, atol=1e-5, rtol=1e-5), "mismatch vs reference (case 2)"

    print("KERNEL_OK")
</pallas_src>

<mosaic_0001>
module attributes {stable_mosaic.version = 11 : i64} {
  func.func @_detection_kernel(%arg0: i32, %arg1: memref<24x256xf32, #tpu.memory_space<vmem>>, %arg2: memref<24x256xf32, #tpu.memory_space<vmem>>) attributes {dimension_semantics = [#tpu.dimension_semantics<parallel>], iteration_bounds = array<i64: 2>, scalar_prefetch = 0 : i64, scratch_operands = 0 : i64, tpu.core_type = #tpu.core_type<tc>, window_params = [{transform_indices = @transform_0, window_bounds = array<i64: 24, 256>}, {transform_indices = @transform_1, window_bounds = array<i64: 24, 256>}]} {
    %c0 = arith.constant 0 : index
    %c0_0 = arith.constant 0 : index
    %0 = vector.load %arg1[%c0, %c0_0] : memref<24x256xf32, #tpu.memory_space<vmem>>, vector<24x256xf32>
    %1 = tpu.iota {dimensions = array<i32: 0>} : vector<24x1xi32>
    %c24_i32 = arith.constant 24 : i32
    %2 = arith.muli %arg0, %c24_i32 : i32
    %3 = vector.broadcast %2 : i32 to vector<24x1xi32>
    %4 = arith.addi %1, %3 : vector<24x1xi32>
    %5 = arith.sitofp %4 : vector<24x1xi32> to vector<24x1xf32>
    %cst = arith.constant 8.000000e+00 : f32
    %6 = vector.broadcast %cst : f32 to vector<24x1xf32>
    %7 = arith.divf %5, %6 : vector<24x1xf32>
    %8 = arith.fptosi %7 : vector<24x1xf32> to vector<24x1xi32>
    %9 = arith.sitofp %8 : vector<24x1xi32> to vector<24x1xf32>
    %cst_1 = arith.constant 8.000000e+00 : f32
    %10 = vector.broadcast %cst_1 : f32 to vector<24x1xf32>
    %11 = arith.mulf %9, %10 : vector<24x1xf32>
    %12 = arith.subf %5, %11 : vector<24x1xf32>
    %cst_2 = arith.constant 3.000000e+00 : f32
    %13 = vector.broadcast %cst_2 : f32 to vector<24x1xf32>
    %14 = arith.divf %9, %13 : vector<24x1xf32>
    %15 = arith.fptosi %14 : vector<24x1xf32> to vector<24x1xi32>
    %16 = arith.sitofp %15 : vector<24x1xi32> to vector<24x1xf32>
    %cst_3 = arith.constant 3.000000e+00 : f32
    %17 = vector.broadcast %cst_3 : f32 to vector<24x1xf32>
    %18 = arith.mulf %16, %17 : vector<24x1xf32>
    %19 = arith.subf %9, %18 : vector<24x1xf32>
    %cst_4 = arith.constant 0.000000e+00 : f32
    %20 = vector.broadcast %cst_4 : f32 to vector<24x1xf32>
    %21 = arith.cmpf oeq, %12, %20 : vector<24x1xf32>
    %cst_5 = arith.constant 1.000000e+00 : f32
    %22 = vector.broadcast %cst_5 : f32 to vector<24x1xf32>
    %23 = arith.cmpf oeq, %12, %22 : vector<24x1xf32>
    %cst_6 = arith.constant 2.000000e+00 : f32
    %24 = vector.broadcast %cst_6 : f32 to vector<24x1xf32>
    %25 = arith.cmpf oeq, %12, %24 : vector<24x1xf32>
    %cst_7 = arith.constant 3.000000e+00 : f32
    %26 = vector.broadcast %cst_7 : f32 to vector<24x1xf32>
    %27 = arith.cmpf oeq, %12, %26 : vector<24x1xf32>
    %28 = arith.ori %25, %27 : vector<24x1xi1>
    %cst_8 = arith.constant 3.300000e+01 : f32
    %29 = vector.broadcast %cst_8 : f32 to vector<24x1xf32>
    %cst_9 = arith.constant 2.300000e+01 : f32
    %30 = vector.broadcast %cst_9 : f32 to vector<24x1xf32>
    %31 = arith.select %27, %30, %29 : vector<24x1xi1>, vector<24x1xf32>
    %cst_10 = arith.constant 0.000000e+00 : f32
    %32 = vector.broadcast %cst_10 : f32 to vector<24x1xf32>
    %33 = arith.cmpf oeq, %19, %32 : vector<24x1xf32>
    %34 = arith.andi %33, %25 : vector<24x1xi1>
    %cst_11 = arith.constant 1.000000e+01 : f32
    %35 = vector.broadcast %cst_11 : f32 to vector<24x1xf32>
    %36 = arith.select %34, %35, %31 : vector<24x1xi1>, vector<24x1xf32>
    %37 = arith.andi %33, %27 : vector<24x1xi1>
    %cst_12 = arith.constant 1.300000e+01 : f32
    %38 = vector.broadcast %cst_12 : f32 to vector<24x1xf32>
    %39 = arith.select %37, %38, %36 : vector<24x1xi1>, vector<24x1xf32>
    %cst_13 = arith.constant 1.000000e+00 : f32
    %40 = vector.broadcast %cst_13 : f32 to vector<24x1xf32>
    %41 = arith.cmpf oeq, %19, %40 : vector<24x1xf32>
    %42 = arith.andi %41, %25 : vector<24x1xi1>
    %cst_14 = arith.constant 1.600000e+01 : f32
    %43 = vector.broadcast %cst_14 : f32 to vector<24x1xf32>
    %44 = arith.select %42, %43, %39 : vector<24x1xi1>, vector<24x1xf32>
    %45 = arith.andi %41, %27 : vector<24x1xi1>
    %cst_15 = arith.constant 3.000000e+01 : f32
    %46 = vector.broadcast %cst_15 : f32 to vector<24x1xf32>
    %47 = arith.select %45, %46, %44 : vector<24x1xi1>, vector<24x1xf32>
    %48 = arith.ori %21, %23 : vector<24x1xi1>
    %cst_16 = arith.constant 1.000000e+00 : f32
    %49 = vector.broadcast %cst_16 : f32 to vector<24x1xf32>
    %50 = arith.select %28, %47, %49 : vector<24x1xi1>, vector<24x1xf32>
    %cst_17 = arith.constant 2.000000e+00 : f32
    %51 = vector.broadcast %cst_17 : f32 to vector<24x1xf32>
    %52 = arith.select %48, %51, %50 : vector<24x1xi1>, vector<24x1xf32>
    %cst_18 = arith.constant 1.000000e+00 : f32
    %cst_19 = arith.constant -1.000000e+00 : f32
    %53 = vector.broadcast %cst_18 : f32 to vector<24x1xf32>
    %54 = vector.broadcast %cst_19 : f32 to vector<24x1xf32>
    %55 = arith.select %28, %53, %54 : vector<24x1xi1>, vector<24x1xf32>
    %56 = tpu.iota {dimensions = array<i32: 1>} : vector<1x256xi32>
    %57 = arith.sitofp %56 : vector<1x256xi32> to vector<1x256xf32>
    %cst_20 = arith.constant 1.600000e+01 : f32
    %58 = vector.broadcast %cst_20 : f32 to vector<1x256xf32>
    %59 = arith.divf %57, %58 : vector<1x256xf32>
    %60 = arith.fptosi %59 : vector<1x256xf32> to vector<1x256xi32>
    %61 = arith.sitofp %60 : vector<1x256xi32> to vector<1x256xf32>
    %cst_21 = arith.constant 1.600000e+01 : f32
    %62 = vector.broadcast %cst_21 : f32 to vector<1x256xf32>
    %63 = arith.mulf %61, %62 : vector<1x256xf32>
    %64 = arith.subf %57, %63 : vector<1x256xf32>
    %cst_22 = arith.constant 0.000000e+00 : f32
    %65 = vector.shape_cast %23 : vector<24x1xi1> to vector<24x1xi1>
    %66 = vector.broadcast %65 : vector<24x1xi1> to vector<24x256xi1>
    %67 = vector.shape_cast %61 : vector<1x256xf32> to vector<1x256xf32>
    %68 = vector.broadcast %67 : vector<1x256xf32> to vector<24x256xf32>
    %69 = vector.broadcast %cst_22 : f32 to vector<24x256xf32>
    %70 = arith.select %66, %68, %69 : vector<24x256xi1>, vector<24x256xf32>
    %71 = vector.shape_cast %21 : vector<24x1xi1> to vector<24x1xi1>
    %72 = vector.broadcast %71 : vector<24x1xi1> to vector<24x256xi1>
    %73 = vector.shape_cast %64 : vector<1x256xf32> to vector<1x256xf32>
    %74 = vector.broadcast %73 : vector<1x256xf32> to vector<24x256xf32>
    %75 = arith.select %72, %74, %70 : vector<24x256xi1>, vector<24x256xf32>
    %76 = vector.broadcast %55 : vector<24x1xf32> to vector<24x256xf32>
    %77 = arith.mulf %0, %76 : vector<24x256xf32>
    %78 = math.exp %77 : vector<24x256xf32>
    %cst_23 = arith.constant 1.000000e+00 : f32
    %79 = vector.broadcast %cst_23 : f32 to vector<24x256xf32>
    %80 = arith.addf %79, %78 : vector<24x256xf32>
    %81 = tpu.reciprocal %80 : vector<24x256xf32> -> vector<24x256xf32>
    %82 = arith.addf %81, %75 : vector<24x256xf32>
    %83 = vector.shape_cast %28 : vector<24x1xi1> to vector<24x1xi1>
    %84 = vector.broadcast %83 : vector<24x1xi1> to vector<24x256xi1>
    %85 = arith.select %84, %78, %82 : vector<24x256xi1>, vector<24x256xf32>
    %86 = vector.broadcast %52 : vector<24x1xf32> to vector<24x256xf32>
    %87 = arith.mulf %85, %86 : vector<24x256xf32>
    %c0_24 = arith.constant 0 : index
    %c0_25 = arith.constant 0 : index
    %88 = vector.load %arg2[%c0_24, %c0_25] : memref<24x256xf32, #tpu.memory_space<vmem>>, vector<24x256xf32>
    tpu.vector_store %arg2[%c0_24, %c0_25], %87 {strides = array<i32>} : memref<24x256xf32, #tpu.memory_space<vmem>>, vector<24x256xf32>,
    return
  }
  func.func @transform_0(%arg0: i32) -> (i32, i32) {
    %c0_i32 = arith.constant 0 : i32
    %c0_i32_0 = arith.constant 0 : i32
    return %arg0, %c0_i32 : i32, i32
  }
  func.func @transform_1(%arg0: i32) -> (i32, i32) {
    %c0_i32 = arith.constant 0 : i32
    %c0_i32_0 = arith.constant 0 : i32
    return %arg0, %c0_i32 : i32, i32
  }
}

</mosaic_0001>

<llo_original>
// kernel: tpu_custom_call.1
$region0: #{tpu_custom_call.1}
  #allocation0 [shape = 'u32[]', space=smem, size = 0x4, offset = 0x4, fixed_abs, tag = 'smem constant byte address 0x4 - core index']
  #allocation1 [shape = 'u32[72,128]{1,0:T(1,128)}', space=vmem, size = 0x9000, scoped, tag = 'internal scratch']
  %s0 = inlined_call_operand.hbm [shape: f32[48,256], index: 0, kind: input, shape index: {}]
  %s1 = inlined_call_operand.hbm [shape: f32[48,256], index: 1, kind: output, shape index: {}]
  %s2 = sld [smem:[#allocation0]]
  $region41: #{tpu_custom_call.1} parent=0
    _
  %s4 = ssub.s32 1, %s2
  %s5 = scalar_select 0, %s4, %s2
  $region1: #{tpu_custom_call.1} parent=0
    #allocation2 [shape = 'u8[49152]{0}', space=vmem, size = 0xc000, scoped, tag = 'input window, operand 0']
    #allocation3 [shape = 's32[2]{0}', space=sflag, size = 0x8, scoped, tag = 'scoped memory for tpu_custom_call.1']
    #allocation4 [shape = 's32[2]{0}', space=sflag, size = 0x8, scoped, tag = 'scoped memory for tpu_custom_call.1']
    #allocation5 [shape = 'u8[49152]{0}', space=vmem, size = 0xc000, scoped, tag = 'output window, operand 0']
    %6 = vsyncpa [#allocation3], 0
    %s7 = scalar_lea.sflag [#allocation3], 1
    %8 = vsyncpa %s7, 0
    %9 = vsyncpa [#allocation4], 0
    %s10 = scalar_lea.sflag [#allocation4], 1
    %11 = vsyncpa %s10, 0
    loop: start=0, step=1, limit=4
    $region2: #{tpu_custom_call.1} parent=1 // loop_pre_header
      _
    $region3: #{tpu_custom_call.1} parent=1 // loop_header
      %s13 = sphi 0, %s17
      %p14 = scmp.ge.s32.totalorder %s13, 4
      %s23 = sphi 0, %s25
      %s26 = sphi 0, %s23
      %s27 = sphi 0, %s26
      %s43 = sphi 0, %s27
      %s49 = sphi 0, %s51
      %s52 = sphi 0, %s49
      %s53 = sphi 0, %s52
      %s69 = sphi 0, %s53
    $region4: #{tpu_custom_call.1} parent=1 // loop_header_branch
      %16 = sbr.rel (%p14) target = $region8
    $region5: #{tpu_custom_call.1} parent=1 // loop_body
      %s18 = ssub.s32 %s13, 1
      %s19 = ssub.s32 %s13, 2
      %s20 = sadd.s32 %s13, 1
      %s21 = ssub.s32 %s13, %s20
      %p22 = scmp.eq.s32.totalorder %s21, 0
      %s24 = sadd.s32 %s23, 1
      %s25 = scalar_select %p22, %s23, %s24
      %p28 = pneg %p22
      %p29 = scmp.eq.s32.totalorder %s13, 1
      %p30 = por %p28, %p29
      %p31 = scmp.ne.s32.totalorder %s23, %s26
      %p32 = scmp.eq.s32.totalorder %s13, 0
      %p33 = por %p31, %p32
      %p34 = scmp.ne.s32.totalorder %s23, %s26
      %p35 = scmp.eq.s32.totalorder %s18, 1
      %p36 = por %p34, %p35
      %p37 = scmp.ne.s32.totalorder %s26, %s27
      %p38 = scmp.eq.s32.totalorder %s18, 0
      %p39 = por %p37, %p38
      %p40 = scmp.ne.s32.totalorder %s26, %s27
      %p41 = scmp.eq.s32.totalorder %s19, 1
      %p42 = por %p40, %p41
      %p44 = scmp.ne.s32.totalorder %s27, %s43
      %p45 = scmp.eq.s32.totalorder %s19, 0
      %p46 = por %p44, %p45
      %s47 = ssub.s32 %s13, %s20
      %p48 = scmp.eq.s32.totalorder %s47, 0
      %s50 = sadd.s32 %s49, 1
      %s51 = scalar_select %p48, %s49, %s50
      %p54 = pneg %p48
      %p55 = scmp.eq.s32.totalorder %s13, 1
      %p56 = por %p54, %p55
      %p57 = scmp.ne.s32.totalorder %s49, %s52
      %p58 = scmp.eq.s32.totalorder %s13, 0
      %p59 = por %p57, %p58
      %p60 = scmp.ne.s32.totalorder %s49, %s52
      %p61 = scmp.eq.s32.totalorder %s18, 1
      %p62 = por %p60, %p61
      %p63 = scmp.ne.s32.totalorder %s52, %s53
      %p64 = scmp.eq.s32.totalorder %s18, 0
      %p65 = por %p63, %p64
      %p66 = scmp.ne.s32.totalorder %s52, %s53
      %p67 = scmp.eq.s32.totalorder %s19, 1
      %p68 = por %p66, %p67
      %p70 = scmp.ne.s32.totalorder %s53, %s69
      %p71 = scmp.eq.s32.totalorder %s19, 0
      %p72 = por %p70, %p71
      %p73 = scmp.le.s32.totalorder 1, %s13
      %p74 = scmp.lt.s32.totalorder %s13, 3
      %p75 = pnand %p73, %p74
      %p76 = pneg %p75
      // Predicated region
      $region9: #{tpu_custom_call.1} parent=5 // pred_check
        _
      $region10: #{tpu_custom_call.1} parent=5 // pred_check_branch
        %78 = sbr.rel (%p75) target = $region12
      $region11: #{tpu_custom_call.1} parent=5 // pred_region
        %s79 = ssub.s32 %s13, 1
      $region12: #{tpu_custom_call.1} parent=5 // pred_fallthru
        _
      %p80 = scmp.lt.s32.totalorder %s13, 2
      // Predicated region
      $region13: #{tpu_custom_call.1} parent=5 // pred_check
        %p81 = pneg %p80
      $region14: #{tpu_custom_call.1} parent=5 // pred_check_branch
        %83 = sbr.rel (%p81) target = $region16
      $region15: #{tpu_custom_call.1} parent=5 // pred_region
        // Predicated region
        $region17: #{tpu_custom_call.1} parent=15 // pred_check
          %p84 = pneg %p33
        $region18: #{tpu_custom_call.1} parent=15 // pred_check_branch
          %86 = sbr.rel (%p84) target = $region20
        $region19: #{tpu_custom_call.1} parent=15 // pred_region
          %s87 = sand.u32 %s23, 1
          %s88 = scalar_lea.sflag [#allocation3], %s87
          %s89 = sand.u32 %s23, 1
          %s90 = smul.addr %s89, 48
          %s91 = scalar_lea.vmem [#allocation2], %s90
          %s92 = smul.u32 3, %s13
          %94 = vsyncadd %s88, 0
          %s95 = smul.addr %s92, 2
          %s96 = smul.addr %s95, 8
          %s97 = scalar_lea.hbm %s0, %s96
          %s98 = sshll.u32 %s97, 4
          %s99 = int_to_ptr.hbm [resolvable:$true] %s98
          %s100 = sshll.u32 %s91, 4
          %s101 = int_to_ptr.vmem [resolvable:$true] %s100
          %106 = dma.hbm_to_vmem [thread:$0]  %s99, 768, %s101, %s88, 256, 256, 16
        $region20: #{tpu_custom_call.1} parent=15 // pred_fallthru
          _
      $region16: #{tpu_custom_call.1} parent=5 // pred_fallthru
        _
      %p107 = scmp.le.s32.totalorder 1, %s13
      %p108 = scmp.lt.s32.totalorder %s13, 3
      %p109 = pnand %p107, %p108
      %p110 = pneg %p109
      // Predicated region
      $region21: #{tpu_custom_call.1} parent=5 // pred_check
        _
      $region22: #{tpu_custom_call.1} parent=5 // pred_check_branch
        %112 = sbr.rel (%p109) target = $region24
      $region23: #{tpu_custom_call.1} parent=5 // pred_region
        %s113 = ssub.s32 %s13, 1
        %s114 = sand.u32 %s26, 1
        %s115 = scalar_lea.sflag [#allocation3], %s114
        %s116 = sand.u32 %s26, 1
        %s117 = smul.addr %s116, 48
        %s118 = scalar_lea.vmem [#allocation2], %s117
        // Predicated region
        $region25: #{tpu_custom_call.1} parent=23 // pred_check
          %p119 = pneg %p39
        $region26: #{tpu_custom_call.1} parent=23 // pred_check_branch
          %121 = sbr.rel (%p119) target = $region28
        $region27: #{tpu_custom_call.1} parent=23 // pred_region
          %123 = dma.done %s115, 768
        $region28: #{tpu_custom_call.1} parent=23 // pred_fallthru
          _
        %s124 = sand.u32 %s26, 1
        %s125 = scalar_lea.sflag [#allocation3], %s124
        %s126 = sand.u32 %s26, 1
        %s127 = smul.addr %s126, 48
        %s128 = scalar_lea.vmem [#allocation2], %s127
        %p129 = pneg %p39
        %p130 = pneg %p36
        %p131 = pneg %p65
        %p132 = pneg %p62
        %s133 = sand.u32 %s52, 1
        %s134 = scalar_lea.sflag [#allocation4], %s133
        %s135 = sand.u32 %s52, 1
        %s136 = smul.addr %s135, 48
        %s137 = scalar_lea.vmem [#allocation5], %s136
        %s138 = smul.u32 3, %s18
        %s139 = smul.u32 3, %s18
        %v140 = vld [vmem:[%s118] sm:$0xff]
        %v141 = vld [vmem:[%s118 + $0x8] sm:$0xff]
        %v142 = vld [vmem:[%s118 + $0x10] sm:$0xff]
        %v143 = vld [vmem:[%s118 + $0x18] sm:$0xff]
        %v144 = vld [vmem:[%s118 + $0x20] sm:$0xff]
        %v145 = vld [vmem:[%s118 + $0x28] sm:$0xff]
        %v146 = vlaneseq
        %v147 = vshrl.u32 %v146, 7
        %v148 = vadd.s32 %v147, 8
        %v149 = vadd.s32 %v147, 16
        %s150 = smul.u32 %s18, 24
        %v151 = vstv %s150
        %v152 = vadd.s32 %v147, %v151
        %v153 = vadd.s32 %v148, %v151
        %v154 = vadd.s32 %v149, %v151
        %v155 = vcvt.s32.f32 %v152
        %v156 = vcvt.s32.f32 %v153
        %v157 = vcvt.s32.f32 %v154
        %v158 = vrcp.pop 8.0
        %v159 = vmul.f32 8.0, %v158
        %v160 = vsub.f32 1.0, %v159
        %v161 = vmul.f32 %v158, %v160
        %v162 = vadd.f32 %v158, %v161
        %vm163 = vweird.f32 %v158
        %v164 = vsel %vm163, %v158, %v162
        %v165 = vmul.f32 %v155, %v164
        %v166 = vmul.f32 %v156, %v164
        %v167 = vmul.f32 %v157, %v164
        %v168 = vcvt.f32.s32.to.zero.pseudo %v165
        %v169 = vcvt.f32.s32.to.zero.pseudo %v166
        %v170 = vcvt.f32.s32.to.zero.pseudo %v167
        %v171 = vcvt.s32.f32 %v168
        %v172 = vcvt.s32.f32 %v169
        %v173 = vcvt.s32.f32 %v170
        %v174 = vmul.f32 %v171, 8.0
        %v175 = vmul.f32 %v172, 8.0
        %v176 = vmul.f32 %v173, 8.0
        %v177 = vsub.f32 %v155, %v174
        %v178 = vsub.f32 %v156, %v175
        %v179 = vsub.f32 %v157, %v176
        %v180 = vrcp.pop 3.0
        %v181 = vmul.f32 3.0, %v180
        %v182 = vsub.f32 1.0, %v181
        %v183 = vmul.f32 %v180, %v182
        %v184 = vadd.f32 %v180, %v183
        %vm185 = vweird.f32 %v180
        %v186 = vsel %vm185, %v180, %v184
        %v187 = vmul.f32 %v171, %v186
        %v188 = vmul.f32 %v172, %v186
        %v189 = vmul.f32 %v173, %v186
        %v190 = vcvt.f32.s32.to.zero.pseudo %v187
        %v191 = vcvt.f32.s32.to.zero.pseudo %v188
        %v192 = vcvt.f32.s32.to.zero.pseudo %v189
        %v193 = vcvt.s32.f32 %v190
        %v194 = vcvt.s32.f32 %v191
        %v195 = vcvt.s32.f32 %v192
        %v196 = vmul.f32 %v193, 3.0
        %v197 = vmul.f32 %v194, 3.0
        %v198 = vmul.f32 %v195, 3.0
        %v199 = vsub.f32 %v171, %v196
        %v200 = vsub.f32 %v172, %v197
        %v201 = vsub.f32 %v173, %v198
        %vm202 = vcmp.eq.f32.partialorder %v177, 0.0
        %vm203 = vcmp.eq.f32.partialorder %v178, 0.0
        %vm204 = vcmp.eq.f32.partialorder %v179, 0.0
        %vm205 = vcmp.eq.f32.partialorder %v177, 1.0
        %vm206 = vcmp.eq.f32.partialorder %v178, 1.0
        %vm207 = vcmp.eq.f32.partialorder %v179, 1.0
        %vm208 = vcmp.eq.f32.partialorder %v177, 2.0
        %vm209 = vcmp.eq.f32.partialorder %v178, 2.0
        %vm210 = vcmp.eq.f32.partialorder %v179, 2.0
        %vm211 = vcmp.eq.f32.partialorder %v177, 3.0
        %vm212 = vcmp.eq.f32.partialorder %v178, 3.0
        %vm213 = vcmp.eq.f32.partialorder %v179, 3.0
        %vm214 = vmor %vm208, %vm211
        %vm215 = vmor %vm209, %vm212
        %vm216 = vmor %vm210, %vm213
        %v217 = vsel %vm211, 23.0, 33.0
        %v218 = vsel %vm212, 23.0, 33.0
        %v219 = vsel %vm213, 23.0, 33.0
        %vm220 = vcmp.eq.f32.partialorder %v199, 0.0
        %vm221 = vcmp.eq.f32.partialorder %v200, 0.0
        %vm222 = vcmp.eq.f32.partialorder %v201, 0.0
        %vm223 = vmand %vm220, %vm208
        %vm224 = vmand %vm221, %vm209
        %vm225 = vmand %vm222, %vm210
        %v226 = vsel %vm223, 10.0, %v217
        %v227 = vsel %vm224, 10.0, %v218
        %v228 = vsel %vm225, 10.0, %v219
        %vm229 = vmand %vm220, %vm211
        %vm230 = vmand %vm221, %vm212
        %vm231 = vmand %vm222, %vm213
        %v232 = vsel %vm229, 13.0, %v226
        %v233 = vsel %vm230, 13.0, %v227
        %v234 = vsel %vm231, 13.0, %v228
        %vm235 = vcmp.eq.f32.partialorder %v199, 1.0
        %vm236 = vcmp.eq.f32.partialorder %v200, 1.0
        %vm237 = vcmp.eq.f32.partialorder %v201, 1.0
        %vm238 = vmand %vm235, %vm208
        %vm239 = vmand %vm236, %vm209
        %vm240 = vmand %vm237, %vm210
        %v241 = vsel %vm238, 16.0, %v232
        %v242 = vsel %vm239, 16.0, %v233
        %v243 = vsel %vm240, 16.0, %v234
        %vm244 = vmand %vm235, %vm211
        %vm245 = vmand %vm236, %vm212
        %vm246 = vmand %vm237, %vm213
        %v247 = vsel %vm244, 30.0, %v241
        %v248 = vsel %vm245, 30.0, %v242
        %v249 = vsel %vm246, 30.0, %v243
        %vm250 = vmor %vm202, %vm205
        %vm251 = vmor %vm203, %vm206
        %vm252 = vmor %vm204, %vm207
        %v253 = vsel %vm214, %v247, 1.0
        %v254 = vsel %vm215, %v248, 1.0
        %v255 = vsel %vm216, %v249, 1.0
        %v256 = vsel %vm250, 2.0, %v253
        %v257 = vsel %vm251, 2.0, %v254
        %v258 = vsel %vm252, 2.0, %v255
        %v259 = vsel %vm214, 1.0, -1.0
        %v260 = vsel %vm215, 1.0, -1.0
        %v261 = vsel %vm216, 1.0, -1.0
        %v262 = vlaneseq
        %v263 = vand.u32 %v262, 127
        %v264 = vadd.s32 %v263, 128
        %v265 = vcvt.s32.f32 %v263
        %v266 = vcvt.s32.f32 %v264
        %v267 = vrcp.pop 16.0
        %v268 = vmul.f32 16.0, %v267
        %v269 = vsub.f32 1.0, %v268
        %v270 = vmul.f32 %v267, %v269
        %v271 = vadd.f32 %v267, %v270
        %vm272 = vweird.f32 %v267
        %v273 = vsel %vm272, %v267, %v271
        %v274 = vmul.f32 %v265, %v273
        %v275 = vmul.f32 %v266, %v273
        %v276 = vcvt.f32.s32.to.zero.pseudo %v274
        %v277 = vcvt.f32.s32.to.zero.pseudo %v275
        %v278 = vcvt.s32.f32 %v276
        %v279 = vcvt.s32.f32 %v277
        %v280 = vmul.f32 %v278, 16.0
        %v281 = vmul.f32 %v279, 16.0
        %v282 = vsub.f32 %v265, %v280
        %v283 = vsub.f32 %v266, %v281
        %v284 = vsel %vm205, 1, 0
        %v285 = vsel %vm206, 1, 0
        %v286 = vsel %vm207, 1, 0
        %vm287 = vcmp.eq.s32.totalorder %v284, 1
        %vm288 = vcmp.eq.s32.totalorder %v285, 1
        %vm289 = vcmp.eq.s32.totalorder %v286, 1
        %v290 = vsel %vm287, %v278, 0.0
        %v291 = vsel %vm287, %v279, 0.0
        %v292 = vsel %vm288, %v278, 0.0
        %v293 = vsel %vm288, %v279, 0.0
        %v294 = vsel %vm289, %v278, 0.0
        %v295 = vsel %vm289, %v279, 0.0
        %v296 = vsel %vm202, 1, 0
        %v297 = vsel %vm203, 1, 0
        %v298 = vsel %vm204, 1, 0
        %vm299 = vcmp.eq.s32.totalorder %v296, 1
        %vm300 = vcmp.eq.s32.totalorder %v297, 1
        %vm301 = vcmp.eq.s32.totalorder %v298, 1
        %v302 = vsel %vm299, %v282, %v290
        %v303 = vsel %vm299, %v283, %v291
        %v304 = vsel %vm300, %v282, %v292
        %v305 = vsel %vm300, %v283, %v293
        %v306 = vsel %vm301, %v282, %v294
        %v307 = vsel %vm301, %v283, %v295
        %v308 = vmul.f32 %v140, %v259
        %v309 = vmul.f32 %v141, %v259
        %v310 = vmul.f32 %v142, %v260
        %v311 = vmul.f32 %v143, %v260
        %v312 = vmul.f32 %v144, %v261
        %v313 = vmul.f32 %v145, %v261
        %v314 = vmul.f32 %v308, 1.442695
        %v315 = vpow.pop %v314
        %v316 = vmul.f32 %v309, 1.442695
        %v317 = vpow.pop %v316
        %v318 = vmul.f32 %v310, 1.442695
        %v319 = vpow.pop %v318
        %v320 = vmul.f32 %v311, 1.442695
        %v321 = vpow.pop %v320
        %v322 = vmul.f32 %v312, 1.442695
        %v323 = vpow.pop %v322
        %v324 = vmul.f32 %v313, 1.442695
        %v325 = vpow.pop %v324
        %v326 = vadd.f32 %v315, 1.0
        %v327 = vadd.f32 %v317, 1.0
        %v328 = vadd.f32 %v319, 1.0
        %v329 = vadd.f32 %v321, 1.0
        %v330 = vadd.f32 %v323, 1.0
        %v331 = vadd.f32 %v325, 1.0
        %v332 = vrcp.pop %v326
        %v333 = vmul.f32 %v326, %v332
        %v334 = vsub.f32 1.0, %v333
        %v335 = vmul.f32 %v332, %v334
        %v336 = vadd.f32 %v332, %v335
        %vm337 = vweird.f32 %v326
        %vm338 = vweird.f32 %v332
        %vm339 = vmor %vm337, %vm338
        %v340 = vsel %vm339, %v332, %v336
        %v341 = vand.u32 2147483647, %v326
        %vm342 = vcmp.eq.f32.partialorder %v341, 8.507059e+37
        %v343 = vand.u32 %v326, 2147483648
        %v344 = vor.u32 1.1754944e-38, %v343
        %v345 = vsel %vm342, %v344, %v340
        %v346 = vrcp.pop %v327
        %v347 = vmul.f32 %v327, %v346
        %v348 = vsub.f32 1.0, %v347
        %v349 = vmul.f32 %v346, %v348
        %v350 = vadd.f32 %v346, %v349
        %vm351 = vweird.f32 %v327
        %vm352 = vweird.f32 %v346
        %vm353 = vmor %vm351, %vm352
        %v354 = vsel %vm353, %v346, %v350
        %v355 = vand.u32 2147483647, %v327
        %vm356 = vcmp.eq.f32.partialorder %v355, 8.507059e+37
        %v357 = vand.u32 %v327, 2147483648
        %v358 = vor.u32 1.1754944e-38, %v357
        %v359 = vsel %vm356, %v358, %v354
        %v360 = vrcp.pop %v328
        %v361 = vmul.f32 %v328, %v360
        %v362 = vsub.f32 1.0, %v361
        %v363 = vmul.f32 %v360, %v362
        %v364 = vadd.f32 %v360, %v363
        %vm365 = vweird.f32 %v328
        %vm366 = vweird.f32 %v360
        %vm367 = vmor %vm365, %vm366
        %v368 = vsel %vm367, %v360, %v364
        %v369 = vand.u32 2147483647, %v328
        %vm370 = vcmp.eq.f32.partialorder %v369, 8.507059e+37
        %v371 = vand.u32 %v328, 2147483648
        %v372 = vor.u32 1.1754944e-38, %v371
        %v373 = vsel %vm370, %v372, %v368
        %v374 = vrcp.pop %v329
        %v375 = vmul.f32 %v329, %v374
        %v376 = vsub.f32 1.0, %v375
        %v377 = vmul.f32 %v374, %v376
        %v378 = vadd.f32 %v374, %v377
        %vm379 = vweird.f32 %v329
        %vm380 = vweird.f32 %v374
        %vm381 = vmor %vm379, %vm380
        %v382 = vsel %vm381, %v374, %v378
        %v383 = vand.u32 2147483647, %v329
        %vm384 = vcmp.eq.f32.partialorder %v383, 8.507059e+37
        %v385 = vand.u32 %v329, 2147483648
        %v386 = vor.u32 1.1754944e-38, %v385
        %v387 = vsel %vm384, %v386, %v382
        %v388 = vrcp.pop %v330
        %v389 = vmul.f32 %v330, %v388
        %v390 = vsub.f32 1.0, %v389
        %v391 = vmul.f32 %v388, %v390
        %v392 = vadd.f32 %v388, %v391
        %vm393 = vweird.f32 %v330
        %vm394 = vweird.f32 %v388
        %vm395 = vmor %vm393, %vm394
        %v396 = vsel %vm395, %v388, %v392
        %v397 = vand.u32 2147483647, %v330
        %vm398 = vcmp.eq.f32.partialorder %v397, 8.507059e+37
        %v399 = vand.u32 %v330, 2147483648
        %v400 = vor.u32 1.1754944e-38, %v399
        %v401 = vsel %vm398, %v400, %v396
        %v402 = vrcp.pop %v331
        %v403 = vmul.f32 %v331, %v402
        %v404 = vsub.f32 1.0, %v403
        %v405 = vmul.f32 %v402, %v404
        %v406 = vadd.f32 %v402, %v405
        %vm407 = vweird.f32 %v331
        %vm408 = vweird.f32 %v402
        %vm409 = vmor %vm407, %vm408
        %v410 = vsel %vm409, %v402, %v406
        %v411 = vand.u32 2147483647, %v331
        %vm412 = vcmp.eq.f32.partialorder %v411, 8.507059e+37
        %v413 = vand.u32 %v331, 2147483648
        %v414 = vor.u32 1.1754944e-38, %v413
        %v415 = vsel %vm412, %v414, %v410
        %v416 = vadd.f32 %v345, %v302
        %v417 = vadd.f32 %v359, %v303
        %v418 = vadd.f32 %v373, %v304
        %v419 = vadd.f32 %v387, %v305
        %v420 = vadd.f32 %v401, %v306
        %v421 = vadd.f32 %v415, %v307
        %v422 = vsel %vm214, 1, 0
        %v423 = vsel %vm215, 1, 0
        %v424 = vsel %vm216, 1, 0
        %vm425 = vcmp.eq.s32.totalorder %v422, 1
        %vm426 = vcmp.eq.s32.totalorder %v423, 1
        %vm427 = vcmp.eq.s32.totalorder %v424, 1
        %v428 = vsel %vm425, %v315, %v416
        %v429 = vsel %vm425, %v317, %v417
        %v430 = vsel %vm426, %v319, %v418
        %v431 = vsel %vm426, %v321, %v419
        %v432 = vsel %vm427, %v323, %v420
        %v433 = vsel %vm427, %v325, %v421
        %v434 = vmul.f32 %v428, %v256
        %v435 = vmul.f32 %v429, %v256
        %v436 = vmul.f32 %v430, %v257
        %v437 = vmul.f32 %v431, %v257
        %v438 = vmul.f32 %v432, %v258
        %v439 = vmul.f32 %v433, %v258
        %440 = vst [vmem:[%s137] sm:$0xff] %v434
        %441 = vst [vmem:[%s137 + $0x8] sm:$0xff] %v435
        %442 = vst [vmem:[%s137 + $0x10] sm:$0xff] %v436
        %443 = vst [vmem:[%s137 + $0x18] sm:$0xff] %v437
        %444 = vst [vmem:[%s137 + $0x20] sm:$0xff] %v438
        %445 = vst [vmem:[%s137 + $0x28] sm:$0xff] %v439
        %s446 = sand.u32 %s52, 1
        %s447 = scalar_lea.sflag [#allocation4], %s446
        %s448 = sand.u32 %s52, 1
        %s449 = smul.addr %s448, 48
        %s450 = scalar_lea.vmem [#allocation5], %s449
        // Predicated region
        $region29: #{tpu_custom_call.1} parent=23 // pred_check
          %p451 = pneg %p62
        $region30: #{tpu_custom_call.1} parent=23 // pred_check_branch
          %453 = sbr.rel (%p451) target = $region32
        $region31: #{tpu_custom_call.1} parent=23 // pred_region
          %s454 = smul.u32 3, %s18
          %456 = vsyncadd %s447, 0
          %s457 = smul.addr %s454, 2
          %s458 = smul.addr %s457, 8
          %s459 = scalar_lea.hbm %s1, %s458
          %s460 = sshll.u32 %s450, 4
          %s461 = int_to_ptr.vmem [resolvable:$true] %s460
          %s462 = sshll.u32 %s459, 4
          %s463 = int_to_ptr.hbm [resolvable:$true] %s462
          %468 = dma.vmem_to_hbm [thread:$0]  %s461, 768, %s463, %s447, 256, 256, 16
        $region32: #{tpu_custom_call.1} parent=23 // pred_fallthru
          _
      $region24: #{tpu_custom_call.1} parent=5 // pred_fallthru
        _
      %p469 = scmp.le.s32.totalorder 2, %s13
      // Predicated region
      $region33: #{tpu_custom_call.1} parent=5 // pred_check
        %p470 = pneg %p469
      $region34: #{tpu_custom_call.1} parent=5 // pred_check_branch
        %472 = sbr.rel (%p470) target = $region36
      $region35: #{tpu_custom_call.1} parent=5 // pred_region
        %s473 = ssub.s32 %s13, 2
        // Predicated region
        $region37: #{tpu_custom_call.1} parent=35 // pred_check
          %p474 = pneg %p68
        $region38: #{tpu_custom_call.1} parent=35 // pred_check_branch
          %476 = sbr.rel (%p474) target = $region40
        $region39: #{tpu_custom_call.1} parent=35 // pred_region
          %s477 = sand.u32 %s53, 1
          %s478 = scalar_lea.sflag [#allocation4], %s477
          %s479 = sand.u32 %s53, 1
          %s480 = smul.addr %s479, 48
          %s481 = scalar_lea.vmem [#allocation5], %s480
          %483 = dma.done %s478, 768
        $region40: #{tpu_custom_call.1} parent=35 // pred_fallthru
          _
      $region36: #{tpu_custom_call.1} parent=5 // pred_fallthru
        _
    $region6: #{tpu_custom_call.1} parent=1 // loop_footer
      %s17 = sadd.s32 1, %s13
    $region7: #{tpu_custom_call.1} parent=1 // loop_footer_branch
      %12 = sbr.rel target = $region3
    $region8: #{tpu_custom_call.1} parent=1 // loop_exit
      _
    %484 = vsyncpa [#allocation3], 1
    %s485 = scalar_lea.sflag [#allocation3], 1
    %486 = vsyncpa %s485, 1
    %487 = vsyncpa [#allocation4], 1
    %s488 = scalar_lea.sflag [#allocation4], 1
    %489 = vsyncpa %s488, 1

</llo_original>
